<compile_context>
chip_gen: v7x
topology: tpu7x:2x2x1
jax: 0.10.0
libtpu: 0.0.40
codegen_flags: <defaults>
</compile_context>

<pallas_src>
import jax
import jax.numpy as jnp
import numpy as np
from jax.experimental import pallas as pl
from jax.experimental.pallas import tpu as pltpu

_LANES = 128
_TARGET_BLOCK_BYTES = 3 * 1024 * 1024   # per-buffer block; 4x this fits every
                                        # generation's default scoped VMEM.


# ---------------------------------------------------------------------------
# Path 1: pure HBM->HBM DMA copy (no VMEM round-trip, no grid).
# ---------------------------------------------------------------------------
def _dma_copy_kernel(x_hbm, o_hbm, sem):
    cp = pltpu.make_async_copy(x_hbm, o_hbm, sem)
    cp.start()
    cp.wait()


def identity_pallas(x):
    """Identity as a single HBM->HBM DMA; the copy never touches VMEM."""
    return pl.pallas_call(
        _dma_copy_kernel,
        out_shape=jax.ShapeDtypeStruct(x.shape, x.dtype),
        in_specs=[pl.BlockSpec(memory_space=pl.ANY)],
        out_specs=pl.BlockSpec(memory_space=pl.ANY),
        scratch_shapes=[pltpu.SemaphoreType.DMA(())],
    )(x)


# ---------------------------------------------------------------------------
# Path 2: tiled VMEM-staged copy (kept for reference; hardened per review).
# ---------------------------------------------------------------------------
def _copy_kernel(x_ref, o_ref):
    # Pure element-wise copy of one wide, lane-dense tile per grid step.
    o_ref[...] = x_ref[...]


def _sublane_multiple(dtype) -> int:
    """Minimum sublane tile: 8 for 4-byte, 16 for 2-byte, 32 for 1-byte dtypes."""
    itemsize = int(jnp.dtype(dtype).itemsize)
    return max(8, 32 // max(itemsize, 1))


def identity_pallas_tiled(x, target_block_bytes=_TARGET_BLOCK_BYTES):
    """Identity/copy over x, reshaped to a wide lane-dense 2D layout."""
    orig_shape = x.shape
    dtype = x.dtype
    total = int(np.prod(orig_shape))
    itemsize = int(jnp.dtype(dtype).itemsize)
    sub = _sublane_multiple(dtype)

    # Wide lane dimension: the largest candidate that still leaves at least one
    # full (sub, C) tile.  Wide lane-dense tiles -> unmasked wide vst and far
    # fewer DMA descriptors than a hard-coded C=128.
    C = _LANES
    for cand in (4096, 2048, 1024, 512, 256):
        if total >= cand * sub:
            C = cand
            break

    # Pad the flat view so it reshapes exactly into (rows, C) with rows a
    # multiple of the dtype's minimum sublane tile (replaces the old
    # non-128-divisible single-block fallback, which was VMEM-fragile).
    chunk = C * sub
    padded_total = ((total + chunk - 1) // chunk) * chunk
    flat = x.reshape(total)
    if padded_total != total:
        flat = jnp.pad(flat, (0, padded_total - total))
    rows = padded_total // C
    x2d = flat.reshape(rows, C)

    # ~3 MiB per block (1 input + 1 output, each double-buffered => ~12 MiB of
    # VMEM), safe under v5e's 16 MiB and v7x's 32 MiB default scoped limits.
    row_bytes = C * itemsize
    rows_by_bytes = max(sub, (target_block_bytes // row_bytes) // sub * sub)
    block_rows = min(rows, rows_by_bytes)
    grid = (pl.cdiv(rows, block_rows),)   # cdiv grid: no exact-divisor hunt

    y2d = pl.pallas_call(
        _copy_kernel,
        out_shape=jax.ShapeDtypeStruct((rows, C), dtype),
        grid=grid,
        in_specs=[pl.BlockSpec((block_rows, C), lambda i: (i, 0))],
        out_specs=pl.BlockSpec((block_rows, C), lambda i: (i, 0)),
        compiler_params=pltpu.CompilerParams(
            dimension_semantics=("parallel",)
        ),
    )(x2d)

    y = y2d.reshape(padded_total)
    if padded_total != total:
        y = y[:total]
    return y.reshape(orig_shape)


# ---------------------------------------------------------------------------
# Faithful port of the module.
# ---------------------------------------------------------------------------
def lvt_forward(x):
    """Faithful port of LVT.forward: the PyTorch body is `pass` -> returns None.

    No kernel is launched — the module performs no computation, so the optimal
    implementation launches nothing at all.
    """
    # TODO(synk): LVT.forward has an empty body in the reference module; there
    # is no computation to translate, so this returns None (exact semantics).
    return None


if __name__ == "__main__":
    key = jax.random.PRNGKey(0)
    # Small NCHW input consistent with a vision-transformer-style module.
    x = jax.random.normal(key, (2, 4, 16, 16), dtype=jnp.float32)

    # 1) Single HBM->HBM DMA identity (no VMEM staging).
    y_dma = identity_pallas(x)
    jax.block_until_ready(y_dma)
    assert y_dma.shape == x.shape and y_dma.dtype == x.dtype
    assert bool(jnp.array_equal(y_dma, x))

    # 2) Tiled VMEM-staged identity (wide lanes, cdiv grid, dtype-aware tiles).
    y_tiled = identity_pallas_tiled(x)
    jax.block_until_ready(y_tiled)
    assert y_tiled.shape == x.shape and y_tiled.dtype == x.dtype
    assert bool(jnp.array_equal(y_tiled, x))

    # 2b) Odd-size bf16 input exercises the pad-and-slice path and the
    #     16-row minimum sublane tile for 2-byte dtypes.
    x_odd = jax.random.normal(key, (2, 3, 5, 7), dtype=jnp.bfloat16)
    y_odd = identity_pallas_tiled(x_odd)
    jax.block_until_ready(y_odd)
    assert y_odd.shape == x_odd.shape and y_odd.dtype == x_odd.dtype
    assert bool(jnp.array_equal(y_odd, x_odd))

    # Exact LVT.forward semantics: returns None.
    assert lvt_forward(x) is None

    print("KERNEL_OK")
</pallas_src>

<mosaic_0001>
module attributes {stable_mosaic.version = 11 : i64} {
  func.func @_dma_copy_kernel(%arg0: memref<2x4x16x16xf32, #tpu.memory_space<any>>, %arg1: memref<2x4x16x16xf32, #tpu.memory_space<any>>, %arg2: memref<!tpu.dma_semaphore, #tpu.memory_space<semaphore_mem>>) attributes {dimension_semantics = [], scalar_prefetch = 0 : i64, scratch_operands = 1 : i64, tpu.core_type = #tpu.core_type<tc>} {
    tpu.enqueue_dma source(%arg0 : memref<2x4x16x16xf32, #tpu.memory_space<any>>) target(%arg1 : memref<2x4x16x16xf32, #tpu.memory_space<any>>) target_semaphore(%arg2 : memref<!tpu.dma_semaphore, #tpu.memory_space<semaphore_mem>>)
    tpu.wait_dma2 semaphore(%arg2 : memref<!tpu.dma_semaphore, #tpu.memory_space<semaphore_mem>>) src(%arg0 : memref<2x4x16x16xf32, #tpu.memory_space<any>>) dst(%arg1 : memref<2x4x16x16xf32, #tpu.memory_space<any>>)
    return
  }
}

</mosaic_0001>

<llo_original>
// kernel: tpu_custom_call.1
$region0: #{tpu_custom_call.1}
  #allocation0 [shape = 'u32[]', space=smem, size = 0x4, offset = 0x4, fixed_abs, tag = 'smem constant byte address 0x4 - core index']
  #allocation1 [shape = 'u32[144,128]{1,0:T(1,128)}', space=vmem, size = 0x12000, scoped, tag = 'internal scratch']
  #allocation2 [shape = 's32[1]{0}', space=sflag, size = 0x4, scoped, tag = 'scratch operand']
  #allocation3 [shape = 's32[]', space=sflag, size = 0x4, offset = 0, fixed_abs, tag = 'sflag constant byte address 0x0 - dummy sync flag']
  #allocation4 [shape = 'u32[0]{0}', space=smem, size = 0, offset = 0, fixed_abs, tag = 'smem constant byte address 0x0 - null']
  %s0 = inlined_call_operand.hbm [shape: f32[2,4,16,16], index: 0, kind: input, shape index: {}]
  %s1 = inlined_call_operand.hbm [shape: f32[2,4,16,16], index: 1, kind: output, shape index: {}]
  %s2 = sld [smem:[#allocation0]]
  $region2: #{tpu_custom_call.1} parent=0
    _
  %s4 = ssub.s32 1, %s2
  %s5 = scalar_select 0, %s4, %s2
  %s7 = sshll.u32 1, 14
  %s8 = sxor.u32 4294967295, %s7
  %s11 = sshll.u32 3, 24
  %s12 = sxor.u32 4294967295, %s11
  %s13 = sand.u32 0, %s12
  %s15 = sor.u32 %s13, 0
  %18 = dma.general %s0, 2048, %s1, [#allocation2], [#allocation3], [#allocation4], %s15, 0
  %s19 = smul.u32 2, 4
  %s20 = smul.u32 %s19, 16
  %s21 = smul.u32 %s20, 1
  %s22 = sshll.u32 %s21, 4
  %23 = dma.done [#allocation2], %s22
  %24 = vsyncmov [#allocation2]
  %s25 = vpop.sfrf %24
  %p26 = scmp.eq.s32.totalorder %s25, 0
  %p27 = pneg %p26
  %29 = shalt.err (%p27)

</llo_original>
